<compile_context>
chip_gen: v7x
topology: tpu7x:2x2x1
jax: 0.10.0
libtpu: 0.0.40
codegen_flags: <defaults>
</compile_context>

<pallas_src>
import functools

import jax
import jax.numpy as jnp
from jax import lax
from jax.experimental import pallas as pl
from jax.experimental.pallas import tpu as pltpu


def _bilstm_kernel(xg_ref, lens_ref, whh_ref, out_ref, h_scr, c_scr, *, t_total, t_chunk):
    # xg_ref : (t_chunk, Bt, 8H) f32  precomputed input gates, layout [i_f i_b|f_f f_b|o_f o_b|g_f g_b]
    # lens_ref: (Bt, 1) int32        sequence lengths
    # whh_ref: (2H, 8H) bf16         block-diagonal recurrent weights (fwd rows -> fwd lanes, ...)
    # out_ref: (Bt, 2H) f32          fused final hidden [h_fwd | h_bwd]
    # h_scr/c_scr: (Bt, 2H) f32      state, persistent across the time grid axis
    _, Bt, G = xg_ref.shape
    H2 = G // 4
    H = H2 // 2

    tc = pl.program_id(1)

    @pl.when(tc == 0)
    def _init():
        h_scr[...] = jnp.zeros_like(h_scr)
        c_scr[...] = jnp.zeros_like(c_scr)

    w = whh_ref[...]                 # (2H, 8H) bf16
    lens = lens_ref[...]             # (Bt, 1) int32
    # lane j < H -> forward direction, lane j >= H -> backward direction (loop-invariant)
    is_fwd = lax.broadcasted_iota(jnp.int32, (Bt, H2), 1) < H

    def body(t_local, carry):
        h, c = carry
        t_glob = tc * t_chunk + t_local
        # Single fused recurrent matmul for both directions: one MXU push per timestep.
        gates = xg_ref[t_local] + jnp.dot(h.astype(w.dtype), w,
                                          preferred_element_type=jnp.float32)   # (Bt, 8H) f32
        sg = jax.nn.sigmoid(gates[:, :3 * H2])        # contiguous [i | f | o] slab -> one EUP pass
        i = sg[:, 0 * H2:1 * H2]
        f = sg[:, 1 * H2:2 * H2]
        o = sg[:, 2 * H2:3 * H2]
        g = jnp.tanh(gates[:, 3 * H2:4 * H2])
        c_new = f * c + i * g
        h_new = o * jnp.tanh(c_new)
        # pack_padded_sequence semantics: freeze state outside each sequence's valid range.
        # fwd lanes advance while t_glob < len; bwd lanes while 0 <= t_total-1-t_glob < len
        # (the >= 0 guard also covers zero-padded time steps when T was padded up to the chunking).
        t_eff = jnp.where(is_fwd, t_glob, t_total - 1 - t_glob)
        valid = (t_eff >= 0) & (t_eff < lens)
        h = jnp.where(valid, h_new, h)
        c = jnp.where(valid, c_new, c)
        return h, c

    # t_chunk is small & static -> full unroll gives the LLO scheduler cross-iteration visibility.
    h_fin, c_fin = lax.fori_loop(0, t_chunk, body, (h_scr[...], c_scr[...]), unroll=True)
    h_scr[...] = h_fin
    c_scr[...] = c_fin
    # Fused layout [h_fwd | h_bwd] == torch.cat(torch.unbind(hidden), dim=-1); write directly.
    out_ref[...] = h_fin


def char_lstm_forward(x, params, pad_index=0, b_tile_max=256, t_chunk_max=32):
    """x: int32 (B, T) token ids.  Returns (B, nOut) float32 (nOut = 2H)."""
    emb = params['embedding']                                  # (nChars, E)
    B, T = x.shape
    H = params['wih_f'].shape[1] // 4
    H2 = 2 * H
    G = 4 * H2
    perm = [0, 1, 3, 2]   # PyTorch gate order [i, f, g, o] -> kernel order [i, f, o, g]

    # ---- glue in plain JAX: embedding gather, lengths, hoisted input projection ----
    lens = jnp.sum((x != pad_index).astype(jnp.int32), axis=1)[:, None]      # (B, 1)
    xemb = jnp.transpose(emb[x], (1, 0, 2)).astype(jnp.bfloat16)             # (T, B, E) time-major

    xg_f = jnp.einsum('tbe,eg->tbg', xemb, params['wih_f'].astype(jnp.bfloat16),
                      preferred_element_type=jnp.float32) + params['b_f']    # (T, B, 4H)
    xg_b = jnp.einsum('tbe,eg->tbg', xemb, params['wih_b'].astype(jnp.bfloat16),
                      preferred_element_type=jnp.float32) + params['b_b']    # (T, B, 4H)
    # Reorder gates to [i,f,o,g], interleave directions per gate, time-reverse backward stream.
    xg_f4 = xg_f.reshape(T, B, 4, H)[:, :, perm, :]
    xg_b4 = xg_b[::-1].reshape(T, B, 4, H)[:, :, perm, :]
    xg = jnp.stack([xg_f4, xg_b4], axis=3).reshape(T, B, G)                  # (T, B, 8H)

    # Block-diagonal recurrent weight (2H, 8H): fwd h rows feed only fwd gate lanes, etc.
    w_blk = jnp.zeros((H2, 4, 2, H), jnp.float32)
    w_blk = w_blk.at[:H, :, 0, :].set(params['whh_f'].reshape(H, 4, H)[:, perm, :])
    w_blk = w_blk.at[H:, :, 1, :].set(params['whh_b'].reshape(H, 4, H)[:, perm, :])
    w_blk = w_blk.reshape(H2, G).astype(jnp.bfloat16)

    # ---- tiling: batch axis parallel (megacore), time axis sequential with resident state ----
    b_tile = B if B <= b_tile_max else b_tile_max
    n_b = pl.cdiv(B, b_tile)
    B_pad = n_b * b_tile
    t_chunk = T if T <= t_chunk_max else t_chunk_max
    n_t = pl.cdiv(T, t_chunk)
    T_pad = n_t * t_chunk

    if B_pad != B or T_pad != T:
        xg = jnp.pad(xg, ((0, T_pad - T), (0, B_pad - B), (0, 0)))
    if B_pad != B:
        lens = jnp.pad(lens, ((0, B_pad - B), (0, 0)))         # len 0 -> padded rows stay zero

    kernel = functools.partial(_bilstm_kernel, t_total=T, t_chunk=t_chunk)

    out = pl.pallas_call(
        kernel,
        out_shape=jax.ShapeDtypeStruct((B_pad, H2), jnp.float32),
        grid_spec=pltpu.PrefetchScalarGridSpec(
            num_scalar_prefetch=0,
            grid=(n_b, n_t),
            in_specs=[
                pl.BlockSpec((t_chunk, b_tile, G), lambda b, t: (t, b, 0)),   # input-gate chunks
                pl.BlockSpec((b_tile, 1), lambda b, t: (b, 0)),               # sequence lengths
                pl.BlockSpec((H2, G), lambda b, t: (0, 0)),                   # recurrent weights (resident)
            ],
            out_specs=pl.BlockSpec((b_tile, H2), lambda b, t: (b, 0)),
            scratch_shapes=[pltpu.VMEM((b_tile, H2), jnp.float32),            # h state
                            pltpu.VMEM((b_tile, H2), jnp.float32)],           # c state
        ),
        compiler_params=pltpu.CompilerParams(
            dimension_semantics=("parallel", "arbitrary")),
    )(xg, lens, w_blk)
    return out[:B]


def _reference(x, params, pad_index):
    """Pure-JAX f32 reference reproducing the PyTorch module's forward semantics."""
    emb = params['embedding'][x]                              # (B, T, E)
    B, T, _ = emb.shape
    H = params['wih_f'].shape[1] // 4
    lens = jnp.sum((x != pad_index).astype(jnp.int32), axis=1)

    def run_dir(wih, whh, b, reverse):
        h = jnp.zeros((B, H), jnp.float32)
        c = jnp.zeros((B, H), jnp.float32)
        ts = range(T - 1, -1, -1) if reverse else range(T)
        for t in ts:
            gates = emb[:, t, :] @ wih + h @ whh + b
            i = jax.nn.sigmoid(gates[:, 0 * H:1 * H])
            f = jax.nn.sigmoid(gates[:, 1 * H:2 * H])
            g = jnp.tanh(gates[:, 2 * H:3 * H])
            o = jax.nn.sigmoid(gates[:, 3 * H:4 * H])
            c_new = f * c + i * g
            h_new = o * jnp.tanh(c_new)
            valid = (t < lens)[:, None]
            h = jnp.where(valid, h_new, h)
            c = jnp.where(valid, c_new, c)
        return h

    h_f = run_dir(params['wih_f'], params['whh_f'], params['b_f'], reverse=False)
    h_b = run_dir(params['wih_b'], params['whh_b'], params['b_b'], reverse=True)
    return jnp.concatenate([h_f, h_b], axis=-1)


if __name__ == "__main__":
    nChars, nEmbed, nOut = 32, 16, 32
    padIndex = 0
    B, T = 2, 8
    H = nOut // 2

    key = jax.random.PRNGKey(0)
    keys = jax.random.split(key, 8)
    s = 1.0 / float(H) ** 0.5

    # Shapes mirror torch.nn.Embedding / torch.nn.LSTM(bidirectional=True); LSTM weights are stored
    # transposed vs PyTorch (W_ih: (E, 4H), W_hh: (H, 4H)) with PyTorch gate order [i, f, g, o];
    # b_* folds PyTorch's b_ih + b_hh into one bias per direction.
    params = {
        'embedding': jax.random.normal(keys[0], (nChars, nEmbed), jnp.float32),
        'wih_f': jax.random.uniform(keys[1], (nEmbed, 4 * H), jnp.float32, -s, s),
        'whh_f': jax.random.uniform(keys[2], (H, 4 * H), jnp.float32, -s, s),
        'b_f':   jax.random.uniform(keys[3], (1, 4 * H), jnp.float32, -s, s),
        'wih_b': jax.random.uniform(keys[4], (nEmbed, 4 * H), jnp.float32, -s, s),
        'whh_b': jax.random.uniform(keys[5], (H, 4 * H), jnp.float32, -s, s),
        'b_b':   jax.random.uniform(keys[6], (1, 4 * H), jnp.float32, -s, s),
    }

    # token ids in [1, nChars) with strictly trailing padding (padIndex = 0); all lengths > 0
    x = jax.random.randint(keys[7], (B, T), 1, nChars, dtype=jnp.int32)
    lens = jnp.array([T, T - 3], dtype=jnp.int32)
    pos = jnp.arange(T)[None, :]
    x = jnp.where(pos < lens[:, None], x, padIndex)

    ref = jax.block_until_ready(_reference(x, params, padIndex))

    # Single-time-chunk path (n_t = 1).
    out = jax.block_until_ready(char_lstm_forward(x, params, pad_index=padIndex))
    assert out.shape == (B, nOut)
    assert bool(jnp.all(jnp.isfinite(out)))
    assert float(jnp.max(jnp.abs(out - ref))) < 2e-2, float(jnp.max(jnp.abs(out - ref)))

    # Time-chunked path (n_t = 3, with one zero-padded time step) — exercises resident-state grid.
    out2 = jax.block_until_ready(char_lstm_forward(x, params, pad_index=padIndex, t_chunk_max=3))
    assert float(jnp.max(jnp.abs(out2 - ref))) < 2e-2, float(jnp.max(jnp.abs(out2 - ref)))

    print("KERNEL_OK")
</pallas_src>

<mosaic_0001>
module attributes {stable_mosaic.version = 11 : i64} {
  func.func @_bilstm_kernel(%arg0: i32, %arg1: i32, %arg2: memref<8x2x128xf32, #tpu.memory_space<vmem>>, %arg3: memref<2x1xi32, #tpu.memory_space<vmem>>, %arg4: memref<32x128xbf16, #tpu.memory_space<vmem>>, %arg5: memref<2x32xf32, #tpu.memory_space<vmem>>, %arg6: memref<2x32xf32, #tpu.memory_space<vmem>>, %arg7: memref<2x32xf32, #tpu.memory_space<vmem>>) attributes {dimension_semantics = [#tpu.dimension_semantics<parallel>, #tpu.dimension_semantics<arbitrary>], iteration_bounds = array<i64: 1, 1>, scalar_prefetch = 0 : i64, scratch_operands = 2 : i64, tpu.core_type = #tpu.core_type<tc>, window_params = [{transform_indices = @transform_0, window_bounds = array<i64: 8, 2, 128>}, {transform_indices = @transform_1, window_bounds = array<i64: 2, 1>}, {pipeline_mode = #tpu.pipeline_mode<synchronous>, transform_indices = @transform_2, window_bounds = array<i64: 32, 128>}, {transform_indices = @transform_3, window_bounds = array<i64: 2, 32>}]} {
    %c0_i32 = arith.constant 0 : i32
    %0 = arith.cmpi eq, %arg1, %c0_i32 : i32
    %1 = arith.extui %0 : i1 to i32
    %c0_i32_0 = arith.constant 0 : i32
    %2 = arith.cmpi ne, %1, %c0_i32_0 : i32
    scf.if %2 {
      %cst_70 = arith.constant 0.000000e+00 : f32
      %293 = vector.broadcast %cst_70 : f32 to vector<2x32xf32>
      %c0_71 = arith.constant 0 : index
      %c0_72 = arith.constant 0 : index
      %294 = vector.load %arg6[%c0_71, %c0_72] : memref<2x32xf32, #tpu.memory_space<vmem>>, vector<2x32xf32>
      tpu.vector_store %arg6[%c0_71, %c0_72], %293 {strides = array<i32>} : memref<2x32xf32, #tpu.memory_space<vmem>>, vector<2x32xf32>,
      %cst_73 = arith.constant 0.000000e+00 : f32
      %295 = vector.broadcast %cst_73 : f32 to vector<2x32xf32>
      %c0_74 = arith.constant 0 : index
      %c0_75 = arith.constant 0 : index
      %296 = vector.load %arg7[%c0_74, %c0_75] : memref<2x32xf32, #tpu.memory_space<vmem>>, vector<2x32xf32>
      tpu.vector_store %arg7[%c0_74, %c0_75], %295 {strides = array<i32>} : memref<2x32xf32, #tpu.memory_space<vmem>>, vector<2x32xf32>,
    } else {
    }
    %c0 = arith.constant 0 : index
    %c0_1 = arith.constant 0 : index
    %3 = vector.load %arg4[%c0, %c0_1] : memref<32x128xbf16, #tpu.memory_space<vmem>>, vector<32x128xbf16>
    %c0_2 = arith.constant 0 : index
    %c0_3 = arith.constant 0 : index
    %4 = vector.load %arg3[%c0_2, %c0_3] : memref<2x1xi32, #tpu.memory_space<vmem>>, vector<2x1xi32>
    %5 = tpu.iota {dimensions = array<i32: 1>} : vector<2x32xi32>
    %c16_i32 = arith.constant 16 : i32
    %6 = vector.broadcast %c16_i32 : i32 to vector<2x32xi32>
    %7 = arith.cmpi slt, %5, %6 : vector<2x32xi32>
    %c0_4 = arith.constant 0 : index
    %c0_5 = arith.constant 0 : index
    %8 = vector.load %arg6[%c0_4, %c0_5] : memref<2x32xf32, #tpu.memory_space<vmem>>, vector<2x32xf32>
    %c0_6 = arith.constant 0 : index
    %c0_7 = arith.constant 0 : index
    %9 = vector.load %arg7[%c0_6, %c0_7] : memref<2x32xf32, #tpu.memory_space<vmem>>, vector<2x32xf32>
    %c0_i32_8 = arith.constant 0 : i32
    %c8_i32 = arith.constant 8 : i32
    %10 = arith.muli %arg1, %c8_i32 : i32
    %11 = arith.addi %10, %c0_i32_8 : i32
    %12 = arith.index_cast %c0_i32_8 : i32 to index
    %c0_9 = arith.constant 0 : index
    %c0_10 = arith.constant 0 : index
    %13 = vector.load %arg2[%12, %c0_9, %c0_10] : memref<8x2x128xf32, #tpu.memory_space<vmem>>, vector<1x2x128xf32>
    %14 = vector.shape_cast %13 : vector<1x2x128xf32> to vector<2x128xf32>
    %15 = arith.truncf %8 : vector<2x32xf32> to vector<2x32xbf16>
    %cst = arith.constant dense<0.000000e+00> : vector<2x128xf32>
    %16 = tpu.matmul %15, %3, %cst {dimension_numbers = #tpu.dot_dimension_numbers<[1], [0], [0], [1], [0, 0, 1, 1], [], []>} : vector<2x32xbf16>, vector<32x128xbf16>, vector<2x128xf32> -> vector<2x128xf32>
    %17 = arith.addf %14, %16 : vector<2x128xf32>
    %18 = vector.extract_strided_slice %17 {offsets = [0, 0], sizes = [2, 96], strides = [1, 1]} : vector<2x128xf32> to vector<2x96xf32>
    %19 = arith.negf %18 : vector<2x96xf32>
    %20 = math.exp %19 : vector<2x96xf32>
    %cst_11 = arith.constant 1.000000e+00 : f32
    %21 = vector.broadcast %cst_11 : f32 to vector<2x96xf32>
    %22 = arith.addf %21, %20 : vector<2x96xf32>
    %23 = arith.divf %21, %22 : vector<2x96xf32>
    %24 = vector.extract_strided_slice %23 {offsets = [0, 0], sizes = [2, 32], strides = [1, 1]} : vector<2x96xf32> to vector<2x32xf32>
    %25 = vector.extract_strided_slice %23 {offsets = [0, 32], sizes = [2, 32], strides = [1, 1]} : vector<2x96xf32> to vector<2x32xf32>
    %26 = vector.extract_strided_slice %23 {offsets = [0, 64], sizes = [2, 32], strides = [1, 1]} : vector<2x96xf32> to vector<2x32xf32>
    %27 = vector.extract_strided_slice %17 {offsets = [0, 96], sizes = [2, 32], strides = [1, 1]} : vector<2x128xf32> to vector<2x32xf32>
    %28 = math.tanh %27 : vector<2x32xf32>
    %29 = arith.mulf %25, %9 : vector<2x32xf32>
    %30 = arith.mulf %24, %28 : vector<2x32xf32>
    %31 = arith.addf %29, %30 : vector<2x32xf32>
    %32 = math.tanh %31 : vector<2x32xf32>
    %33 = arith.mulf %26, %32 : vector<2x32xf32>
    %c7_i32 = arith.constant 7 : i32
    %34 = arith.subi %c7_i32, %11 : i32
    %35 = vector.broadcast %11 : i32 to vector<2x32xi32>
    %36 = vector.broadcast %34 : i32 to vector<2x32xi32>
    %37 = arith.select %7, %35, %36 : vector<2x32xi1>, vector<2x32xi32>
    %c0_i32_12 = arith.constant 0 : i32
    %38 = vector.broadcast %c0_i32_12 : i32 to vector<2x32xi32>
    %39 = arith.cmpi sge, %37, %38 : vector<2x32xi32>
    %40 = vector.broadcast %4 : vector<2x1xi32> to vector<2x32xi32>
    %41 = arith.cmpi slt, %37, %40 : vector<2x32xi32>
    %42 = arith.andi %39, %41 : vector<2x32xi1>
    %43 = arith.select %42, %33, %8 : vector<2x32xi1>, vector<2x32xf32>
    %44 = arith.select %42, %31, %9 : vector<2x32xi1>, vector<2x32xf32>
    %c1_i32 = arith.constant 1 : i32
    %c8_i32_13 = arith.constant 8 : i32
    %45 = arith.muli %arg1, %c8_i32_13 : i32
    %46 = arith.addi %45, %c1_i32 : i32
    %47 = arith.index_cast %c1_i32 : i32 to index
    %c0_14 = arith.constant 0 : index
    %c0_15 = arith.constant 0 : index
    %48 = vector.load %arg2[%47, %c0_14, %c0_15] : memref<8x2x128xf32, #tpu.memory_space<vmem>>, vector<1x2x128xf32>
    %49 = vector.shape_cast %48 : vector<1x2x128xf32> to vector<2x128xf32>
    %50 = arith.truncf %43 : vector<2x32xf32> to vector<2x32xbf16>
    %cst_16 = arith.constant dense<0.000000e+00> : vector<2x128xf32>
    %51 = tpu.matmul %50, %3, %cst_16 {dimension_numbers = #tpu.dot_dimension_numbers<[1], [0], [0], [1], [0, 0, 1, 1], [], []>} : vector<2x32xbf16>, vector<32x128xbf16>, vector<2x128xf32> -> vector<2x128xf32>
    %52 = arith.addf %49, %51 : vector<2x128xf32>
    %53 = vector.extract_strided_slice %52 {offsets = [0, 0], sizes = [2, 96], strides = [1, 1]} : vector<2x128xf32> to vector<2x96xf32>
    %54 = arith.negf %53 : vector<2x96xf32>
    %55 = math.exp %54 : vector<2x96xf32>
    %cst_17 = arith.constant 1.000000e+00 : f32
    %56 = vector.broadcast %cst_17 : f32 to vector<2x96xf32>
    %57 = arith.addf %56, %55 : vector<2x96xf32>
    %58 = arith.divf %56, %57 : vector<2x96xf32>
    %59 = vector.extract_strided_slice %58 {offsets = [0, 0], sizes = [2, 32], strides = [1, 1]} : vector<2x96xf32> to vector<2x32xf32>
    %60 = vector.extract_strided_slice %58 {offsets = [0, 32], sizes = [2, 32], strides = [1, 1]} : vector<2x96xf32> to vector<2x32xf32>
    %61 = vector.extract_strided_slice %58 {offsets = [0, 64], sizes = [2, 32], strides = [1, 1]} : vector<2x96xf32> to vector<2x32xf32>
    %62 = vector.extract_strided_slice %52 {offsets = [0, 96], sizes = [2, 32], strides = [1, 1]} : vector<2x128xf32> to vector<2x32xf32>
    %63 = math.tanh %62 : vector<2x32xf32>
    %64 = arith.mulf %60, %44 : vector<2x32xf32>
    %65 = arith.mulf %59, %63 : vector<2x32xf32>
    %66 = arith.addf %64, %65 : vector<2x32xf32>
    %67 = math.tanh %66 : vector<2x32xf32>
    %68 = arith.mulf %61, %67 : vector<2x32xf32>
    %c7_i32_18 = arith.constant 7 : i32
    %69 = arith.subi %c7_i32_18, %46 : i32
    %70 = vector.broadcast %46 : i32 to vector<2x32xi32>
    %71 = vector.broadcast %69 : i32 to vector<2x32xi32>
    %72 = arith.select %7, %70, %71 : vector<2x32xi1>, vector<2x32xi32>
    %c0_i32_19 = arith.constant 0 : i32
    %73 = vector.broadcast %c0_i32_19 : i32 to vector<2x32xi32>
    %74 = arith.cmpi sge, %72, %73 : vector<2x32xi32>
    %75 = vector.broadcast %4 : vector<2x1xi32> to vector<2x32xi32>
    %76 = arith.cmpi slt, %72, %75 : vector<2x32xi32>
    %77 = arith.andi %74, %76 : vector<2x32xi1>
    %78 = arith.select %77, %68, %43 : vector<2x32xi1>, vector<2x32xf32>
    %79 = arith.select %77, %66, %44 : vector<2x32xi1>, vector<2x32xf32>
    %c2_i32 = arith.constant 2 : i32
    %c8_i32_20 = arith.constant 8 : i32
    %80 = arith.muli %arg1, %c8_i32_20 : i32
    %81 = arith.addi %80, %c2_i32 : i32
    %82 = arith.index_cast %c2_i32 : i32 to index
    %c0_21 = arith.constant 0 : index
    %c0_22 = arith.constant 0 : index
    %83 = vector.load %arg2[%82, %c0_21, %c0_22] : memref<8x2x128xf32, #tpu.memory_space<vmem>>, vector<1x2x128xf32>
    %84 = vector.shape_cast %83 : vector<1x2x128xf32> to vector<2x128xf32>
    %85 = arith.truncf %78 : vector<2x32xf32> to vector<2x32xbf16>
    %cst_23 = arith.constant dense<0.000000e+00> : vector<2x128xf32>
    %86 = tpu.matmul %85, %3, %cst_23 {dimension_numbers = #tpu.dot_dimension_numbers<[1], [0], [0], [1], [0, 0, 1, 1], [], []>} : vector<2x32xbf16>, vector<32x128xbf16>, vector<2x128xf32> -> vector<2x128xf32>
    %87 = arith.addf %84, %86 : vector<2x128xf32>
    %88 = vector.extract_strided_slice %87 {offsets = [0, 0], sizes = [2, 96], strides = [1, 1]} : vector<2x128xf32> to vector<2x96xf32>
    %89 = arith.negf %88 : vector<2x96xf32>
    %90 = math.exp %89 : vector<2x96xf32>
    %cst_24 = arith.constant 1.000000e+00 : f32
    %91 = vector.broadcast %cst_24 : f32 to vector<2x96xf32>
    %92 = arith.addf %91, %90 : vector<2x96xf32>
    %93 = arith.divf %91, %92 : vector<2x96xf32>
    %94 = vector.extract_strided_slice %93 {offsets = [0, 0], sizes = [2, 32], strides = [1, 1]} : vector<2x96xf32> to vector<2x32xf32>
    %95 = vector.extract_strided_slice %93 {offsets = [0, 32], sizes = [2, 32], strides = [1, 1]} : vector<2x96xf32> to vector<2x32xf32>
    %96 = vector.extract_strided_slice %93 {offsets = [0, 64], sizes = [2, 32], strides = [1, 1]} : vector<2x96xf32> to vector<2x32xf32>
    %97 = vector.extract_strided_slice %87 {offsets = [0, 96], sizes = [2, 32], strides = [1, 1]} : vector<2x128xf32> to vector<2x32xf32>
    %98 = math.tanh %97 : vector<2x32xf32>
    %99 = arith.mulf %95, %79 : vector<2x32xf32>
    %100 = arith.mulf %94, %98 : vector<2x32xf32>
    %101 = arith.addf %99, %100 : vector<2x32xf32>
    %102 = math.tanh %101 : vector<2x32xf32>
    %103 = arith.mulf %96, %102 : vector<2x32xf32>
    %c7_i32_25 = arith.constant 7 : i32
    %104 = arith.subi %c7_i32_25, %81 : i32
    %105 = vector.broadcast %81 : i32 to vector<2x32xi32>
    %106 = vector.broadcast %104 : i32 to vector<2x32xi32>
    %107 = arith.select %7, %105, %106 : vector<2x32xi1>, vector<2x32xi32>
    %c0_i32_26 = arith.constant 0 : i32
    %108 = vector.broadcast %c0_i32_26 : i32 to vector<2x32xi32>
    %109 = arith.cmpi sge, %107, %108 : vector<2x32xi32>
    %110 = vector.broadcast %4 : vector<2x1xi32> to vector<2x32xi32>
    %111 = arith.cmpi slt, %107, %110 : vector<2x32xi32>
    %112 = arith.andi %109, %111 : vector<2x32xi1>
    %113 = arith.select %112, %103, %78 : vector<2x32xi1>, vector<2x32xf32>
    %114 = arith.select %112, %101, %79 : vector<2x32xi1>, vector<2x32xf32>
    %c3_i32 = arith.constant 3 : i32
    %c8_i32_27 = arith.constant 8 : i32
    %115 = arith.muli %arg1, %c8_i32_27 : i32
    %116 = arith.addi %115, %c3_i32 : i32
    %117 = arith.index_cast %c3_i32 : i32 to index
    %c0_28 = arith.constant 0 : index
    %c0_29 = arith.constant 0 : index
    %118 = vector.load %arg2[%117, %c0_28, %c0_29] : memref<8x2x128xf32, #tpu.memory_space<vmem>>, vector<1x2x128xf32>
    %119 = vector.shape_cast %118 : vector<1x2x128xf32> to vector<2x128xf32>
    %120 = arith.truncf %113 : vector<2x32xf32> to vector<2x32xbf16>
    %cst_30 = arith.constant dense<0.000000e+00> : vector<2x128xf32>
    %121 = tpu.matmul %120, %3, %cst_30 {dimension_numbers = #tpu.dot_dimension_numbers<[1], [0], [0], [1], [0, 0, 1, 1], [], []>} : vector<2x32xbf16>, vector<32x128xbf16>, vector<2x128xf32> -> vector<2x128xf32>
    %122 = arith.addf %119, %121 : vector<2x128xf32>
    %123 = vector.extract_strided_slice %122 {offsets = [0, 0], sizes = [2, 96], strides = [1, 1]} : vector<2x128xf32> to vector<2x96xf32>
    %124 = arith.negf %123 : vector<2x96xf32>
    %125 = math.exp %124 : vector<2x96xf32>
    %cst_31 = arith.constant 1.000000e+00 : f32
    %126 = vector.broadcast %cst_31 : f32 to vector<2x96xf32>
    %127 = arith.addf %126, %125 : vector<2x96xf32>
    %128 = arith.divf %126, %127 : vector<2x96xf32>
    %129 = vector.extract_strided_slice %128 {offsets = [0, 0], sizes = [2, 32], strides = [1, 1]} : vector<2x96xf32> to vector<2x32xf32>
    %130 = vector.extract_strided_slice %128 {offsets = [0, 32], sizes = [2, 32], strides = [1, 1]} : vector<2x96xf32> to vector<2x32xf32>
    %131 = vector.extract_strided_slice %128 {offsets = [0, 64], sizes = [2, 32], strides = [1, 1]} : vector<2x96xf32> to vector<2x32xf32>
    %132 = vector.extract_strided_slice %122 {offsets = [0, 96], sizes = [2, 32], strides = [1, 1]} : vector<2x128xf32> to vector<2x32xf32>
    %133 = math.tanh %132 : vector<2x32xf32>
    %134 = arith.mulf %130, %114 : vector<2x32xf32>
    %135 = arith.mulf %129, %133 : vector<2x32xf32>
    %136 = arith.addf %134, %135 : vector<2x32xf32>
    %137 = math.tanh %136 : vector<2x32xf32>
    %138 = arith.mulf %131, %137 : vector<2x32xf32>
    %c7_i32_32 = arith.constant 7 : i32
    %139 = arith.subi %c7_i32_32, %116 : i32
    %140 = vector.broadcast %116 : i32 to vector<2x32xi32>
    %141 = vector.broadcast %139 : i32 to vector<2x32xi32>
    %142 = arith.select %7, %140, %141 : vector<2x32xi1>, vector<2x32xi32>
    %c0_i32_33 = arith.constant 0 : i32
    %143 = vector.broadcast %c0_i32_33 : i32 to vector<2x32xi32>
    %144 = arith.cmpi sge, %142, %143 : vector<2x32xi32>
    %145 = vector.broadcast %4 : vector<2x1xi32> to vector<2x32xi32>
    %146 = arith.cmpi slt, %142, %145 : vector<2x32xi32>
    %147 = arith.andi %144, %146 : vector<2x32xi1>
    %148 = arith.select %147, %138, %113 : vector<2x32xi1>, vector<2x32xf32>
    %149 = arith.select %147, %136, %114 : vector<2x32xi1>, vector<2x32xf32>
    %c4_i32 = arith.constant 4 : i32
    %c8_i32_34 = arith.constant 8 : i32
    %150 = arith.muli %arg1, %c8_i32_34 : i32
    %151 = arith.addi %150, %c4_i32 : i32
    %152 = arith.index_cast %c4_i32 : i32 to index
    %c0_35 = arith.constant 0 : index
    %c0_36 = arith.constant 0 : index
    %153 = vector.load %arg2[%152, %c0_35, %c0_36] : memref<8x2x128xf32, #tpu.memory_space<vmem>>, vector<1x2x128xf32>
    %154 = vector.shape_cast %153 : vector<1x2x128xf32> to vector<2x128xf32>
    %155 = arith.truncf %148 : vector<2x32xf32> to vector<2x32xbf16>
    %cst_37 = arith.constant dense<0.000000e+00> : vector<2x128xf32>
    %156 = tpu.matmul %155, %3, %cst_37 {dimension_numbers = #tpu.dot_dimension_numbers<[1], [0], [0], [1], [0, 0, 1, 1], [], []>} : vector<2x32xbf16>, vector<32x128xbf16>, vector<2x128xf32> -> vector<2x128xf32>
    %157 = arith.addf %154, %156 : vector<2x128xf32>
    %158 = vector.extract_strided_slice %157 {offsets = [0, 0], sizes = [2, 96], strides = [1, 1]} : vector<2x128xf32> to vector<2x96xf32>
    %159 = arith.negf %158 : vector<2x96xf32>
    %160 = math.exp %159 : vector<2x96xf32>
    %cst_38 = arith.constant 1.000000e+00 : f32
    %161 = vector.broadcast %cst_38 : f32 to vector<2x96xf32>
    %162 = arith.addf %161, %160 : vector<2x96xf32>
    %163 = arith.divf %161, %162 : vector<2x96xf32>
    %164 = vector.extract_strided_slice %163 {offsets = [0, 0], sizes = [2, 32], strides = [1, 1]} : vector<2x96xf32> to vector<2x32xf32>
    %165 = vector.extract_strided_slice %163 {offsets = [0, 32], sizes = [2, 32], strides = [1, 1]} : vector<2x96xf32> to vector<2x32xf32>
    %166 = vector.extract_strided_slice %163 {offsets = [0, 64], sizes = [2, 32], strides = [1, 1]} : vector<2x96xf32> to vector<2x32xf32>
    %167 = vector.extract_strided_slice %157 {offsets = [0, 96], sizes = [2, 32], strides = [1, 1]} : vector<2x128xf32> to vector<2x32xf32>
    %168 = math.tanh %167 : vector<2x32xf32>
    %169 = arith.mulf %165, %149 : vector<2x32xf32>
    %170 = arith.mulf %164, %168 : vector<2x32xf32>
    %171 = arith.addf %169, %170 : vector<2x32xf32>
    %172 = math.tanh %171 : vector<2x32xf32>
    %173 = arith.mulf %166, %172 : vector<2x32xf32>
    %c7_i32_39 = arith.constant 7 : i32
    %174 = arith.subi %c7_i32_39, %151 : i32
    %175 = vector.broadcast %151 : i32 to vector<2x32xi32>
    %176 = vector.broadcast %174 : i32 to vector<2x32xi32>
    %177 = arith.select %7, %175, %176 : vector<2x32xi1>, vector<2x32xi32>
    %c0_i32_40 = arith.constant 0 : i32
    %178 = vector.broadcast %c0_i32_40 : i32 to vector<2x32xi32>
    %179 = arith.cmpi sge, %177, %178 : vector<2x32xi32>
    %180 = vector.broadcast %4 : vector<2x1xi32> to vector<2x32xi32>
    %181 = arith.cmpi slt, %177, %180 : vector<2x32xi32>
    %182 = arith.andi %179, %181 : vector<2x32xi1>
    %183 = arith.select %182, %173, %148 : vector<2x32xi1>, vector<2x32xf32>
    %184 = arith.select %182, %171, %149 : vector<2x32xi1>, vector<2x32xf32>
    %c5_i32 = arith.constant 5 : i32
    %c8_i32_41 = arith.constant 8 : i32
    %185 = arith.muli %arg1, %c8_i32_41 : i32
    %186 = arith.addi %185, %c5_i32 : i32
    %187 = arith.index_cast %c5_i32 : i32 to index
    %c0_42 = arith.constant 0 : index
    %c0_43 = arith.constant 0 : index
    %188 = vector.load %arg2[%187, %c0_42, %c0_43] : memref<8x2x128xf32, #tpu.memory_space<vmem>>, vector<1x2x128xf32>
    %189 = vector.shape_cast %188 : vector<1x2x128xf32> to vector<2x128xf32>
    %190 = arith.truncf %183 : vector<2x32xf32> to vector<2x32xbf16>
    %cst_44 = arith.constant dense<0.000000e+00> : vector<2x128xf32>
    %191 = tpu.matmul %190, %3, %cst_44 {dimension_numbers = #tpu.dot_dimension_numbers<[1], [0], [0], [1], [0, 0, 1, 1], [], []>} : vector<2x32xbf16>, vector<32x128xbf16>, vector<2x128xf32> -> vector<2x128xf32>
    %192 = arith.addf %189, %191 : vector<2x128xf32>
    %193 = vector.extract_strided_slice %192 {offsets = [0, 0], sizes = [2, 96], strides = [1, 1]} : vector<2x128xf32> to vector<2x96xf32>
    %194 = arith.negf %193 : vector<2x96xf32>
    %195 = math.exp %194 : vector<2x96xf32>
    %cst_45 = arith.constant 1.000000e+00 : f32
    %196 = vector.broadcast %cst_45 : f32 to vector<2x96xf32>
    %197 = arith.addf %196, %195 : vector<2x96xf32>
    %198 = arith.divf %196, %197 : vector<2x96xf32>
    %199 = vector.extract_strided_slice %198 {offsets = [0, 0], sizes = [2, 32], strides = [1, 1]} : vector<2x96xf32> to vector<2x32xf32>
    %200 = vector.extract_strided_slice %198 {offsets = [0, 32], sizes = [2, 32], strides = [1, 1]} : vector<2x96xf32> to vector<2x32xf32>
    %201 = vector.extract_strided_slice %198 {offsets = [0, 64], sizes = [2, 32], strides = [1, 1]} : vector<2x96xf32> to vector<2x32xf32>
    %202 = vector.extract_strided_slice %192 {offsets = [0, 96], sizes = [2, 32], strides = [1, 1]} : vector<2x128xf32> to vector<2x32xf32>
    %203 = math.tanh %202 : vector<2x32xf32>
    %204 = arith.mulf %200, %184 : vector<2x32xf32>
    %205 = arith.mulf %199, %203 : vector<2x32xf32>
    %206 = arith.addf %204, %205 : vector<2x32xf32>
    %207 = math.tanh %206 : vector<2x32xf32>
    %208 = arith.mulf %201, %207 : vector<2x32xf32>
    %c7_i32_46 = arith.constant 7 : i32
    %209 = arith.subi %c7_i32_46, %186 : i32
    %210 = vector.broadcast %186 : i32 to vector<2x32xi32>
    %211 = vector.broadcast %209 : i32 to vector<2x32xi32>
    %212 = arith.select %7, %210, %211 : vector<2x32xi1>, vector<2x32xi32>
    %c0_i32_47 = arith.constant 0 : i32
    %213 = vector.broadcast %c0_i32_47 : i32 to vector<2x32xi32>
    %214 = arith.cmpi sge, %212, %213 : vector<2x32xi32>
    %215 = vector.broadcast %4 : vector<2x1xi32> to vector<2x32xi32>
    %216 = arith.cmpi slt, %212, %215 : vector<2x32xi32>
    %217 = arith.andi %214, %216 : vector<2x32xi1>
    %218 = arith.select %217, %208, %183 : vector<2x32xi1>, vector<2x32xf32>
    %219 = arith.select %217, %206, %184 : vector<2x32xi1>, vector<2x32xf32>
    %c6_i32 = arith.constant 6 : i32
    %c8_i32_48 = arith.constant 8 : i32
    %220 = arith.muli %arg1, %c8_i32_48 : i32
    %221 = arith.addi %220, %c6_i32 : i32
    %222 = arith.index_cast %c6_i32 : i32 to index
    %c0_49 = arith.constant 0 : index
    %c0_50 = arith.constant 0 : index
    %223 = vector.load %arg2[%222, %c0_49, %c0_50] : memref<8x2x128xf32, #tpu.memory_space<vmem>>, vector<1x2x128xf32>
    %224 = vector.shape_cast %223 : vector<1x2x128xf32> to vector<2x128xf32>
    %225 = arith.truncf %218 : vector<2x32xf32> to vector<2x32xbf16>
    %cst_51 = arith.constant dense<0.000000e+00> : vector<2x128xf32>
    %226 = tpu.matmul %225, %3, %cst_51 {dimension_numbers = #tpu.dot_dimension_numbers<[1], [0], [0], [1], [0, 0, 1, 1], [], []>} : vector<2x32xbf16>, vector<32x128xbf16>, vector<2x128xf32> -> vector<2x128xf32>
    %227 = arith.addf %224, %226 : vector<2x128xf32>
    %228 = vector.extract_strided_slice %227 {offsets = [0, 0], sizes = [2, 96], strides = [1, 1]} : vector<2x128xf32> to vector<2x96xf32>
    %229 = arith.negf %228 : vector<2x96xf32>
    %230 = math.exp %229 : vector<2x96xf32>
    %cst_52 = arith.constant 1.000000e+00 : f32
    %231 = vector.broadcast %cst_52 : f32 to vector<2x96xf32>
    %232 = arith.addf %231, %230 : vector<2x96xf32>
    %233 = arith.divf %231, %232 : vector<2x96xf32>
    %234 = vector.extract_strided_slice %233 {offsets = [0, 0], sizes = [2, 32], strides = [1, 1]} : vector<2x96xf32> to vector<2x32xf32>
    %235 = vector.extract_strided_slice %233 {offsets = [0, 32], sizes = [2, 32], strides = [1, 1]} : vector<2x96xf32> to vector<2x32xf32>
    %236 = vector.extract_strided_slice %233 {offsets = [0, 64], sizes = [2, 32], strides = [1, 1]} : vector<2x96xf32> to vector<2x32xf32>
    %237 = vector.extract_strided_slice %227 {offsets = [0, 96], sizes = [2, 32], strides = [1, 1]} : vector<2x128xf32> to vector<2x32xf32>
    %238 = math.tanh %237 : vector<2x32xf32>
    %239 = arith.mulf %235, %219 : vector<2x32xf32>
    %240 = arith.mulf %234, %238 : vector<2x32xf32>
    %241 = arith.addf %239, %240 : vector<2x32xf32>
    %242 = math.tanh %241 : vector<2x32xf32>
    %243 = arith.mulf %236, %242 : vector<2x32xf32>
    %c7_i32_53 = arith.constant 7 : i32
    %244 = arith.subi %c7_i32_53, %221 : i32
    %245 = vector.broadcast %221 : i32 to vector<2x32xi32>
    %246 = vector.broadcast %244 : i32 to vector<2x32xi32>
    %247 = arith.select %7, %245, %246 : vector<2x32xi1>, vector<2x32xi32>
    %c0_i32_54 = arith.constant 0 : i32
    %248 = vector.broadcast %c0_i32_54 : i32 to vector<2x32xi32>
    %249 = arith.cmpi sge, %247, %248 : vector<2x32xi32>
    %250 = vector.broadcast %4 : vector<2x1xi32> to vector<2x32xi32>
    %251 = arith.cmpi slt, %247, %250 : vector<2x32xi32>
    %252 = arith.andi %249, %251 : vector<2x32xi1>
    %253 = arith.select %252, %243, %218 : vector<2x32xi1>, vector<2x32xf32>
    %254 = arith.select %252, %241, %219 : vector<2x32xi1>, vector<2x32xf32>
    %c7_i32_55 = arith.constant 7 : i32
    %c8_i32_56 = arith.constant 8 : i32
    %255 = arith.muli %arg1, %c8_i32_56 : i32
    %256 = arith.addi %255, %c7_i32_55 : i32
    %257 = arith.index_cast %c7_i32_55 : i32 to index
    %c0_57 = arith.constant 0 : index
    %c0_58 = arith.constant 0 : index
    %258 = vector.load %arg2[%257, %c0_57, %c0_58] : memref<8x2x128xf32, #tpu.memory_space<vmem>>, vector<1x2x128xf32>
    %259 = vector.shape_cast %258 : vector<1x2x128xf32> to vector<2x128xf32>
    %260 = arith.truncf %253 : vector<2x32xf32> to vector<2x32xbf16>
    %cst_59 = arith.constant dense<0.000000e+00> : vector<2x128xf32>
    %261 = tpu.matmul %260, %3, %cst_59 {dimension_numbers = #tpu.dot_dimension_numbers<[1], [0], [0], [1], [0, 0, 1, 1], [], []>} : vector<2x32xbf16>, vector<32x128xbf16>, vector<2x128xf32> -> vector<2x128xf32>
    %262 = arith.addf %259, %261 : vector<2x128xf32>
    %263 = vector.extract_strided_slice %262 {offsets = [0, 0], sizes = [2, 96], strides = [1, 1]} : vector<2x128xf32> to vector<2x96xf32>
    %264 = arith.negf %263 : vector<2x96xf32>
    %265 = math.exp %264 : vector<2x96xf32>
    %cst_60 = arith.constant 1.000000e+00 : f32
    %266 = vector.broadcast %cst_60 : f32 to vector<2x96xf32>
    %267 = arith.addf %266, %265 : vector<2x96xf32>
    %268 = arith.divf %266, %267 : vector<2x96xf32>
    %269 = vector.extract_strided_slice %268 {offsets = [0, 0], sizes = [2, 32], strides = [1, 1]} : vector<2x96xf32> to vector<2x32xf32>
    %270 = vector.extract_strided_slice %268 {offsets = [0, 32], sizes = [2, 32], strides = [1, 1]} : vector<2x96xf32> to vector<2x32xf32>
    %271 = vector.extract_strided_slice %268 {offsets = [0, 64], sizes = [2, 32], strides = [1, 1]} : vector<2x96xf32> to vector<2x32xf32>
    %272 = vector.extract_strided_slice %262 {offsets = [0, 96], sizes = [2, 32], strides = [1, 1]} : vector<2x128xf32> to vector<2x32xf32>
    %273 = math.tanh %272 : vector<2x32xf32>
    %274 = arith.mulf %270, %254 : vector<2x32xf32>
    %275 = arith.mulf %269, %273 : vector<2x32xf32>
    %276 = arith.addf %274, %275 : vector<2x32xf32>
    %277 = math.tanh %276 : vector<2x32xf32>
    %278 = arith.mulf %271, %277 : vector<2x32xf32>
    %c7_i32_61 = arith.constant 7 : i32
    %279 = arith.subi %c7_i32_61, %256 : i32
    %280 = vector.broadcast %256 : i32 to vector<2x32xi32>
    %281 = vector.broadcast %279 : i32 to vector<2x32xi32>
    %282 = arith.select %7, %280, %281 : vector<2x32xi1>, vector<2x32xi32>
    %c0_i32_62 = arith.constant 0 : i32
    %283 = vector.broadcast %c0_i32_62 : i32 to vector<2x32xi32>
    %284 = arith.cmpi sge, %282, %283 : vector<2x32xi32>
    %285 = vector.broadcast %4 : vector<2x1xi32> to vector<2x32xi32>
    %286 = arith.cmpi slt, %282, %285 : vector<2x32xi32>
    %287 = arith.andi %284, %286 : vector<2x32xi1>
    %288 = arith.select %287, %278, %253 : vector<2x32xi1>, vector<2x32xf32>
    %289 = arith.select %287, %276, %254 : vector<2x32xi1>, vector<2x32xf32>
    %c8_i32_63 = arith.constant 8 : i32
    %c0_64 = arith.constant 0 : index
    %c0_65 = arith.constant 0 : index
    %290 = vector.load %arg6[%c0_64, %c0_65] : memref<2x32xf32, #tpu.memory_space<vmem>>, vector<2x32xf32>
    tpu.vector_store %arg6[%c0_64, %c0_65], %288 {strides = array<i32>} : memref<2x32xf32, #tpu.memory_space<vmem>>, vector<2x32xf32>,
    %c0_66 = arith.constant 0 : index
    %c0_67 = arith.constant 0 : index
    %291 = vector.load %arg7[%c0_66, %c0_67] : memref<2x32xf32, #tpu.memory_space<vmem>>, vector<2x32xf32>
    tpu.vector_store %arg7[%c0_66, %c0_67], %289 {strides = array<i32>} : memref<2x32xf32, #tpu.memory_space<vmem>>, vector<2x32xf32>,
    %c0_68 = arith.constant 0 : index
    %c0_69 = arith.constant 0 : index
    %292 = vector.load %arg5[%c0_68, %c0_69] : memref<2x32xf32, #tpu.memory_space<vmem>>, vector<2x32xf32>
    tpu.vector_store %arg5[%c0_68, %c0_69], %288 {strides = array<i32>} : memref<2x32xf32, #tpu.memory_space<vmem>>, vector<2x32xf32>,
    return
  }
  func.func @transform_0(%arg0: i32, %arg1: i32) -> (i32, i32, i32) {
    %c0_i32 = arith.constant 0 : i32
    %c0_i32_0 = arith.constant 0 : i32
    return %arg1, %arg0, %c0_i32 : i32, i32, i32
  }
  func.func @transform_1(%arg0: i32, %arg1: i32) -> (i32, i32) {
    %c0_i32 = arith.constant 0 : i32
    %c0_i32_0 = arith.constant 0 : i32
    return %arg0, %c0_i32 : i32, i32
  }
  func.func @transform_2(%arg0: i32, %arg1: i32) -> (i32, i32) {
    %c0_i32 = arith.constant 0 : i32
    %c0_i32_0 = arith.constant 0 : i32
    %c0_i32_1 = arith.constant 0 : i32
    return %c0_i32, %c0_i32_0 : i32, i32
  }
  func.func @transform_3(%arg0: i32, %arg1: i32) -> (i32, i32) {
    %c0_i32 = arith.constant 0 : i32
    %c0_i32_0 = arith.constant 0 : i32
    return %arg0, %c0_i32 : i32, i32
  }
}

</mosaic_0001>

<llo_original>
// kernel: tpu_custom_call.1
$region0: #{tpu_custom_call.1}
  #allocation0 [shape = 'u32[]', space=smem, size = 0x4, offset = 0x4, fixed_abs, tag = 'smem constant byte address 0x4 - core index']
  #allocation1 [shape = 'u32[144,128]{1,0:T(1,128)}', space=vmem, size = 0x12000, scoped, tag = 'internal scratch']
  #allocation2 [shape = 'f32[2,32]{1,0:T(2,128)}', space=vmem, size = 0x400, scoped, tag = 'scratch operand']
  #allocation3 [shape = 'f32[2,32]{1,0:T(2,128)}', space=vmem, size = 0x400, scoped, tag = 'scratch operand']
  %s0 = inlined_call_operand.hbm [shape: f32[8,2,128], index: 0, kind: input, shape index: {}]
  %s1 = inlined_call_operand.vmem [shape: s32[2,1], index: 1, kind: input, shape index: {}]
  %s2 = inlined_call_operand.hbm [shape: bf16[32,128], index: 2, kind: input, shape index: {}]
  %s3 = inlined_call_operand.hbm [shape: f32[2,32], index: 3, kind: output, shape index: {}]
  %s4 = sld [smem:[#allocation0]]
  $region34: #{tpu_custom_call.1} parent=0
    _
  %s6 = ssub.s32 1, %s4
  %s7 = scalar_select 0, %s6, %s4
  $region1: #{tpu_custom_call.1} parent=0
    #allocation4 [shape = 'u8[8192]{0}', space=vmem, size = 0x2000, scoped, tag = 'input window, operand 0, single buffered']
    #allocation5 [shape = 's32[1]{0}', space=sflag, size = 0x4, scoped, tag = 'scoped memory for tpu_custom_call.1']
    #allocation6 [shape = 's32[1]{0}', space=sflag, size = 0x4, scoped, tag = 'scoped memory for tpu_custom_call.1']
    #allocation7 [shape = 'u8[8192]{0}', space=vmem, size = 0x2000, scoped, tag = 'input window, operand 2, single buffered']
    #allocation8 [shape = 's32[1]{0}', space=sflag, size = 0x4, scoped, tag = 'scoped memory for tpu_custom_call.1']
    #allocation9 [shape = 'u8[1024]{0}', space=vmem, size = 0x400, scoped, tag = 'output window, operand 0, single buffered']
    %8 = vsyncpa [#allocation5], 0
    %9 = vsyncpa [#allocation8], 0
    %10 = vsyncpa [#allocation6], 0
    // Predicated region
    $region2: #{tpu_custom_call.1} parent=1 // pred_check
      _
    $region3: #{tpu_custom_call.1} parent=1 // pred_check_branch
      %12 = sbr.rel (0) target = $region5
    $region4: #{tpu_custom_call.1} parent=1 // pred_region
      %s14 = ssub.s32 256, 256
      %15 = vsyncadd [#allocation5], %s14
      %s16 = sshll.u32 [#allocation4], 4
      %s17 = int_to_ptr.vmem [resolvable:$true] %s16
      %22 = dma.hbm_to_vmem [thread:$0]  %s0, 256, %s17, [#allocation5], 32, 32, 2
    $region5: #{tpu_custom_call.1} parent=1 // pred_fallthru
      _
    // Predicated region
    $region6: #{tpu_custom_call.1} parent=1 // pred_check
      _
    $region7: #{tpu_custom_call.1} parent=1 // pred_check_branch
      %24 = sbr.rel (0) target = $region9
    $region8: #{tpu_custom_call.1} parent=1 // pred_region
      _
    $region9: #{tpu_custom_call.1} parent=1 // pred_fallthru
      _
    // Predicated region
    $region10: #{tpu_custom_call.1} parent=1 // pred_check
      _
    $region11: #{tpu_custom_call.1} parent=1 // pred_check_branch
      %26 = sbr.rel (0) target = $region13
    $region12: #{tpu_custom_call.1} parent=1 // pred_region
      %s28 = ssub.s32 256, 256
      %29 = vsyncadd [#allocation8], %s28
      %s30 = sshll.u32 [#allocation7], 4
      %s31 = int_to_ptr.vmem [resolvable:$true] %s30
      %36 = dma.hbm_to_vmem [thread:$0]  %s2, 256, %s31, [#allocation8], 64, 64, 4
    $region13: #{tpu_custom_call.1} parent=1 // pred_fallthru
      _
    // Predicated region
    $region14: #{tpu_custom_call.1} parent=1 // pred_check
      _
    $region15: #{tpu_custom_call.1} parent=1 // pred_check_branch
      %38 = sbr.rel (0) target = $region17
    $region16: #{tpu_custom_call.1} parent=1 // pred_region
      %39 = dma.done [#allocation5], 256
    $region17: #{tpu_custom_call.1} parent=1 // pred_fallthru
      _
    // Predicated region
    $region18: #{tpu_custom_call.1} parent=1 // pred_check
      _
    $region19: #{tpu_custom_call.1} parent=1 // pred_check_branch
      %41 = sbr.rel (0) target = $region21
    $region20: #{tpu_custom_call.1} parent=1 // pred_region
      %42 = dma.done [#allocation8], 256
    $region21: #{tpu_custom_call.1} parent=1 // pred_fallthru
      _
    %p44 = scmp.eq.s32.totalorder 0, 0
    // Predicated region
    $region22: #{tpu_custom_call.1} parent=1 // pred_check
      %p45 = pneg %p44
    $region23: #{tpu_custom_call.1} parent=1 // pred_check_branch
      %47 = sbr.rel (%p45) target = $region25
    $region24: #{tpu_custom_call.1} parent=1 // pred_region
      %vm48 = vcmask 254976
      %49 = vst.msk [vmem:[#allocation2] sm:$0x3] %vm48, 0.0
      %50 = vst.msk [vmem:[#allocation3] sm:$0x3] %vm48, 0.0
    $region25: #{tpu_custom_call.1} parent=1 // pred_fallthru
      _
    %v51 = vld [vmem:[#allocation7] sm:$0xf]
    %v52 = vld [vmem:[#allocation7 + $0x4] sm:$0xf]
    %v53 = vld [vmem:[#allocation7 + $0x8] sm:$0xf]
    %v54 = vld [vmem:[#allocation7 + $0xc] sm:$0xf]
    %v55 = vld [vmem:[%s1] sm:$0x3]
    %v56 = vlaneseq
    %v57 = vand.u32 %v56, 127
    %vm58 = vcmp.lt.s32.totalorder %v57, 16
    %v59 = vld [vmem:[#allocation2] sm:$0x3]
    %v60 = vld [vmem:[#allocation3] sm:$0x3]
    %s61 = smul.u32 0, 8
    %v62 = vld [vmem:[#allocation4] sm:$0x3]
    %v63 = vpack.c.bf16 %v59, %v59
    %v68 = vunpack.c.l.b16 %v51
    %v69 = vunpack.c.l.b16 %v52
    %v70 = vunpack.c.l.b16 %v53
    %v71 = vunpack.c.l.b16 %v54
    %v72 = vpack.c.b16 %v69, %v68
    %v73 = vpack.c.b16 %v71, %v70
    %vm76 = vcmask 261120
    %v78 = vsel %vm76, %v63, 0
    %80 = vmatprep.subr.bf16.mxu0 0
    %81 = vmatpush1.bf16.msra.mxu0 %v72
    %82 = vmatprep.subr.bf16.mxu0 0
    %83 = vmatpush1.bf16.msra.mxu0 %v73
    %84 = vmatprep.subr.bf16.mxu0 0
    %85 = vmatpush1.bf16.msra.mxu0 0
    %86 = vmatprep.subr.bf16.mxu0 0
    %87 = vmatpush1.bf16.msra.mxu0 0
    %88 = vmatprep.subr.bf16.mxu0 0
    %89 = vmatpush1.bf16.msra.mxu0 0
    %90 = vmatprep.subr.bf16.mxu0 0
    %91 = vmatpush1.bf16.msra.mxu0 0
    %92 = vmatprep.subr.bf16.mxu0 0
    %93 = vmatpush1.bf16.msra.mxu0 0
    %94 = vmatprep.subr.bf16.mxu0 0
    %95 = vmatpush1.bf16.msra.mxu0 0
    %96 = vmatprep.subr.bf16.mxu0 0
    %97 = vmatpush1.bf16.msra.mxu0 0
    %98 = vmatprep.subr.bf16.mxu0 0
    %99 = vmatpush1.bf16.msra.mxu0 0
    %100 = vmatprep.subr.bf16.mxu0 0
    %101 = vmatpush1.bf16.msra.mxu0 0
    %102 = vmatprep.subr.bf16.mxu0 0
    %103 = vmatpush1.bf16.msra.mxu0 0
    %104 = vmatprep.subr.bf16.mxu0 0
    %105 = vmatpush1.bf16.msra.mxu0 0
    %106 = vmatprep.subr.bf16.mxu0 0
    %107 = vmatpush1.bf16.msra.mxu0 0
    %108 = vmatprep.subr.bf16.mxu0 0
    %109 = vmatpush1.bf16.msra.mxu0 0
    %110 = vmatprep.subr.bf16.mxu0 0
    %111 = vmatpush1.bf16.msra.mxu0 0
    %112 = vmatprep.mubr.bf16.mxu0 0
    %113 = vmatmul.mubr.bf16.gmra.mrb[0].mxu0 %v78
    %v114 = vpop.f32.mrb[0].mxu0
    %v115 = vadd.f32 0.0, %v114
    %v116 = vpop.f32.mrb[0].mxu0
    %v117 = vpop.f32.mrb[0].mxu0
    %v118 = vpop.f32.mrb[0].mxu0
    %119 = vdwg.mxu0
    %v120 = vadd.f32 %v62, %v115
    %v121 = vxor.u32 %v120, 2147483648
    %v122 = vmul.f32 %v121, 1.442695
    %v123 = vpow.pop %v122
    %v124 = vadd.f32 %v123, 1.0
    %v125 = vrcp.pop %v124
    %v126 = vmul.f32 1.0, %v125
    %v127 = vtanh.pop %v120
    %129 = vrot.lane.b32.xlu0 %v60, 32
    %v130 = vpop.permute.xlu0 %129
    %v132 = vmul.f32 %v126, %v130
    %134 = vrot.lane.b32.xlu0 %v127, 32
    %v135 = vpop.permute.xlu0 %134
    %v137 = vmul.f32 %v126, %v135
    %139 = vrot.lane.b32.xlu0 %v137, 32
    %v140 = vpop.permute.xlu0 %139
    %v142 = vadd.f32 %v132, %v140
    %v143 = vtanh.pop %v142
    %145 = vrot.lane.b32.xlu0 %v143, 32
    %v146 = vpop.permute.xlu0 %145
    %v148 = vmul.f32 %v126, %v146
    %s149 = ssub.s32 7, %s61
    %v150 = vstv %s61
    %v151 = vstv %s149
    %v152 = vsel %vm58, %v150, %v151
    %vm153 = vcmp.ge.s32.totalorder %v152, 0
    %154 = vset.pattern.permute.xlu0 0
    %155 = vperm.xlu0 %154, %v55
    %v156 = vpop.permute.xlu0 %155
    %vm157 = vcmp.lt.s32.totalorder %v152, %v156
    %vm158 = vmand %vm153, %vm157
    %160 = vrot.lane.b32.xlu0 %v148, 64
    %v161 = vpop.permute.xlu0 %160
    %v163 = vsel %vm158, %v161, %v59
    %165 = vrot.lane.b32.xlu0 %v142, 96
    %v166 = vpop.permute.xlu0 %165
    %v168 = vsel %vm158, %v166, %v60
    %s169 = sadd.s32 %s61, 1
    %s170 = scalar_lea.vmem [#allocation4], 2
    %v171 = vld [vmem:[%s170] sm:$0x3]
    %v172 = vpack.c.bf16 %v163, %v163
    %v174 = vsel %vm76, %v172, 0
    %176 = vmatprep.subr.bf16.mxu0 0
    %177 = vmatpush1.bf16.msra.mxu0 %v72
    %178 = vmatprep.subr.bf16.mxu0 0
    %179 = vmatpush1.bf16.msra.mxu0 %v73
    %180 = vmatprep.subr.bf16.mxu0 0
    %181 = vmatpush1.bf16.msra.mxu0 0
    %182 = vmatprep.subr.bf16.mxu0 0
    %183 = vmatpush1.bf16.msra.mxu0 0
    %184 = vmatprep.subr.bf16.mxu0 0
    %185 = vmatpush1.bf16.msra.mxu0 0
    %186 = vmatprep.subr.bf16.mxu0 0
    %187 = vmatpush1.bf16.msra.mxu0 0
    %188 = vmatprep.subr.bf16.mxu0 0
    %189 = vmatpush1.bf16.msra.mxu0 0
    %190 = vmatprep.subr.bf16.mxu0 0
    %191 = vmatpush1.bf16.msra.mxu0 0
    %192 = vmatprep.subr.bf16.mxu0 0
    %193 = vmatpush1.bf16.msra.mxu0 0
    %194 = vmatprep.subr.bf16.mxu0 0
    %195 = vmatpush1.bf16.msra.mxu0 0
    %196 = vmatprep.subr.bf16.mxu0 0
    %197 = vmatpush1.bf16.msra.mxu0 0
    %198 = vmatprep.subr.bf16.mxu0 0
    %199 = vmatpush1.bf16.msra.mxu0 0
    %200 = vmatprep.subr.bf16.mxu0 0
    %201 = vmatpush1.bf16.msra.mxu0 0
    %202 = vmatprep.subr.bf16.mxu0 0
    %203 = vmatpush1.bf16.msra.mxu0 0
    %204 = vmatprep.subr.bf16.mxu0 0
    %205 = vmatpush1.bf16.msra.mxu0 0
    %206 = vmatprep.subr.bf16.mxu0 0
    %207 = vmatpush1.bf16.msra.mxu0 0
    %208 = vmatprep.mubr.bf16.mxu0 0
    %209 = vmatmul.mubr.bf16.gmra.mrb[0].mxu0 %v174
    %v210 = vpop.f32.mrb[0].mxu0
    %v211 = vadd.f32 0.0, %v210
    %v212 = vpop.f32.mrb[0].mxu0
    %v213 = vpop.f32.mrb[0].mxu0
    %v214 = vpop.f32.mrb[0].mxu0
    %215 = vdwg.mxu0
    %v216 = vadd.f32 %v171, %v211
    %v217 = vxor.u32 %v216, 2147483648
    %v218 = vmul.f32 %v217, 1.442695
    %v219 = vpow.pop %v218
    %v220 = vadd.f32 %v219, 1.0
    %v221 = vrcp.pop %v220
    %v222 = vmul.f32 1.0, %v221
    %v223 = vtanh.pop %v216
    %225 = vrot.lane.b32.xlu0 %v168, 32
    %v226 = vpop.permute.xlu0 %225
    %v228 = vmul.f32 %v222, %v226
    %230 = vrot.lane.b32.xlu0 %v223, 32
    %v231 = vpop.permute.xlu0 %230
    %v233 = vmul.f32 %v222, %v231
    %235 = vrot.lane.b32.xlu0 %v233, 32
    %v236 = vpop.permute.xlu0 %235
    %v238 = vadd.f32 %v228, %v236
    %v239 = vtanh.pop %v238
    %241 = vrot.lane.b32.xlu0 %v239, 32
    %v242 = vpop.permute.xlu0 %241
    %v244 = vmul.f32 %v222, %v242
    %s245 = ssub.s32 6, %s61
    %v246 = vstv %s169
    %v247 = vstv %s245
    %v248 = vsel %vm58, %v246, %v247
    %vm249 = vcmp.ge.s32.totalorder %v248, 0
    %vm250 = vcmp.lt.s32.totalorder %v248, %v156
    %vm251 = vmand %vm249, %vm250
    %253 = vrot.lane.b32.xlu0 %v244, 64
    %v254 = vpop.permute.xlu0 %253
    %v256 = vsel %vm251, %v254, %v163
    %258 = vrot.lane.b32.xlu0 %v238, 96
    %v259 = vpop.permute.xlu0 %258
    %v261 = vsel %vm251, %v259, %v168
    %s262 = sadd.s32 %s61, 2
    %s263 = scalar_lea.vmem [#allocation4], 4
    %v264 = vld [vmem:[%s263] sm:$0x3]
    %v265 = vpack.c.bf16 %v256, %v256
    %v267 = vsel %vm76, %v265, 0
    %269 = vmatprep.subr.bf16.mxu0 0
    %270 = vmatpush1.bf16.msra.mxu0 %v72
    %271 = vmatprep.subr.bf16.mxu0 0
    %272 = vmatpush1.bf16.msra.mxu0 %v73
    %273 = vmatprep.subr.bf16.mxu0 0
    %274 = vmatpush1.bf16.msra.mxu0 0
    %275 = vmatprep.subr.bf16.mxu0 0
    %276 = vmatpush1.bf16.msra.mxu0 0
    %277 = vmatprep.subr.bf16.mxu0 0
    %278 = vmatpush1.bf16.msra.mxu0 0
    %279 = vmatprep.subr.bf16.mxu0 0
    %280 = vmatpush1.bf16.msra.mxu0 0
    %281 = vmatprep.subr.bf16.mxu0 0
    %282 = vmatpush1.bf16.msra.mxu0 0
    %283 = vmatprep.subr.bf16.mxu0 0
    %284 = vmatpush1.bf16.msra.mxu0 0
    %285 = vmatprep.subr.bf16.mxu0 0
    %286 = vmatpush1.bf16.msra.mxu0 0
    %287 = vmatprep.subr.bf16.mxu0 0
    %288 = vmatpush1.bf16.msra.mxu0 0
    %289 = vmatprep.subr.bf16.mxu0 0
    %290 = vmatpush1.bf16.msra.mxu0 0
    %291 = vmatprep.subr.bf16.mxu0 0
    %292 = vmatpush1.bf16.msra.mxu0 0
    %293 = vmatprep.subr.bf16.mxu0 0
    %294 = vmatpush1.bf16.msra.mxu0 0
    %295 = vmatprep.subr.bf16.mxu0 0
    %296 = vmatpush1.bf16.msra.mxu0 0
    %297 = vmatprep.subr.bf16.mxu0 0
    %298 = vmatpush1.bf16.msra.mxu0 0
    %299 = vmatprep.subr.bf16.mxu0 0
    %300 = vmatpush1.bf16.msra.mxu0 0
    %301 = vmatprep.mubr.bf16.mxu0 0
    %302 = vmatmul.mubr.bf16.gmra.mrb[0].mxu0 %v267
    %v303 = vpop.f32.mrb[0].mxu0
    %v304 = vadd.f32 0.0, %v303
    %v305 = vpop.f32.mrb[0].mxu0
    %v306 = vpop.f32.mrb[0].mxu0
    %v307 = vpop.f32.mrb[0].mxu0
    %308 = vdwg.mxu0
    %v309 = vadd.f32 %v264, %v304
    %v310 = vxor.u32 %v309, 2147483648
    %v311 = vmul.f32 %v310, 1.442695
    %v312 = vpow.pop %v311
    %v313 = vadd.f32 %v312, 1.0
    %v314 = vrcp.pop %v313
    %v315 = vmul.f32 1.0, %v314
    %v316 = vtanh.pop %v309
    %318 = vrot.lane.b32.xlu0 %v261, 32
    %v319 = vpop.permute.xlu0 %318
    %v321 = vmul.f32 %v315, %v319
    %323 = vrot.lane.b32.xlu0 %v316, 32
    %v324 = vpop.permute.xlu0 %323
    %v326 = vmul.f32 %v315, %v324
    %328 = vrot.lane.b32.xlu0 %v326, 32
    %v329 = vpop.permute.xlu0 %328
    %v331 = vadd.f32 %v321, %v329
    %v332 = vtanh.pop %v331
    %334 = vrot.lane.b32.xlu0 %v332, 32
    %v335 = vpop.permute.xlu0 %334
    %v337 = vmul.f32 %v315, %v335
    %s338 = ssub.s32 5, %s61
    %v339 = vstv %s262
    %v340 = vstv %s338
    %v341 = vsel %vm58, %v339, %v340
    %vm342 = vcmp.ge.s32.totalorder %v341, 0
    %vm343 = vcmp.lt.s32.totalorder %v341, %v156
    %vm344 = vmand %vm342, %vm343
    %346 = vrot.lane.b32.xlu0 %v337, 64
    %v347 = vpop.permute.xlu0 %346
    %v349 = vsel %vm344, %v347, %v256
    %351 = vrot.lane.b32.xlu0 %v331, 96
    %v352 = vpop.permute.xlu0 %351
    %v354 = vsel %vm344, %v352, %v261
    %s355 = sadd.s32 %s61, 3
    %s356 = scalar_lea.vmem [#allocation4], 6
    %v357 = vld [vmem:[%s356] sm:$0x3]
    %v358 = vpack.c.bf16 %v349, %v349
    %v360 = vsel %vm76, %v358, 0
    %362 = vmatprep.subr.bf16.mxu0 0
    %363 = vmatpush1.bf16.msra.mxu0 %v72
    %364 = vmatprep.subr.bf16.mxu0 0
    %365 = vmatpush1.bf16.msra.mxu0 %v73
    %366 = vmatprep.subr.bf16.mxu0 0
    %367 = vmatpush1.bf16.msra.mxu0 0
    %368 = vmatprep.subr.bf16.mxu0 0
    %369 = vmatpush1.bf16.msra.mxu0 0
    %370 = vmatprep.subr.bf16.mxu0 0
    %371 = vmatpush1.bf16.msra.mxu0 0
    %372 = vmatprep.subr.bf16.mxu0 0
    %373 = vmatpush1.bf16.msra.mxu0 0
    %374 = vmatprep.subr.bf16.mxu0 0
    %375 = vmatpush1.bf16.msra.mxu0 0
    %376 = vmatprep.subr.bf16.mxu0 0
    %377 = vmatpush1.bf16.msra.mxu0 0
    %378 = vmatprep.subr.bf16.mxu0 0
    %379 = vmatpush1.bf16.msra.mxu0 0
    %380 = vmatprep.subr.bf16.mxu0 0
    %381 = vmatpush1.bf16.msra.mxu0 0
    %382 = vmatprep.subr.bf16.mxu0 0
    %383 = vmatpush1.bf16.msra.mxu0 0
    %384 = vmatprep.subr.bf16.mxu0 0
    %385 = vmatpush1.bf16.msra.mxu0 0
    %386 = vmatprep.subr.bf16.mxu0 0
    %387 = vmatpush1.bf16.msra.mxu0 0
    %388 = vmatprep.subr.bf16.mxu0 0
    %389 = vmatpush1.bf16.msra.mxu0 0
    %390 = vmatprep.subr.bf16.mxu0 0
    %391 = vmatpush1.bf16.msra.mxu0 0
    %392 = vmatprep.subr.bf16.mxu0 0
    %393 = vmatpush1.bf16.msra.mxu0 0
    %394 = vmatprep.mubr.bf16.mxu0 0
    %395 = vmatmul.mubr.bf16.gmra.mrb[0].mxu0 %v360
    %v396 = vpop.f32.mrb[0].mxu0
    %v397 = vadd.f32 0.0, %v396
    %v398 = vpop.f32.mrb[0].mxu0
    %v399 = vpop.f32.mrb[0].mxu0
    %v400 = vpop.f32.mrb[0].mxu0
    %401 = vdwg.mxu0
    %v402 = vadd.f32 %v357, %v397
    %v403 = vxor.u32 %v402, 2147483648
    %v404 = vmul.f32 %v403, 1.442695
    %v405 = vpow.pop %v404
    %v406 = vadd.f32 %v405, 1.0
    %v407 = vrcp.pop %v406
    %v408 = vmul.f32 1.0, %v407
    %v409 = vtanh.pop %v402
    %411 = vrot.lane.b32.xlu0 %v354, 32
    %v412 = vpop.permute.xlu0 %411
    %v414 = vmul.f32 %v408, %v412
    %416 = vrot.lane.b32.xlu0 %v409, 32
    %v417 = vpop.permute.xlu0 %416
    %v419 = vmul.f32 %v408, %v417
    %421 = vrot.lane.b32.xlu0 %v419, 32
    %v422 = vpop.permute.xlu0 %421
    %v424 = vadd.f32 %v414, %v422
    %v425 = vtanh.pop %v424
    %427 = vrot.lane.b32.xlu0 %v425, 32
    %v428 = vpop.permute.xlu0 %427
    %v430 = vmul.f32 %v408, %v428
    %s431 = ssub.s32 4, %s61
    %v432 = vstv %s355
    %v433 = vstv %s431
    %v434 = vsel %vm58, %v432, %v433
    %vm435 = vcmp.ge.s32.totalorder %v434, 0
    %vm436 = vcmp.lt.s32.totalorder %v434, %v156
    %vm437 = vmand %vm435, %vm436
    %439 = vrot.lane.b32.xlu0 %v430, 64
    %v440 = vpop.permute.xlu0 %439
    %v442 = vsel %vm437, %v440, %v349
    %444 = vrot.lane.b32.xlu0 %v424, 96
    %v445 = vpop.permute.xlu0 %444
    %v447 = vsel %vm437, %v445, %v354
    %s448 = sadd.s32 %s61, 4
    %s449 = scalar_lea.vmem [#allocation4], 8
    %v450 = vld [vmem:[%s449] sm:$0x3]
    %v451 = vpack.c.bf16 %v442, %v442
    %v453 = vsel %vm76, %v451, 0
    %455 = vmatprep.subr.bf16.mxu0 0
    %456 = vmatpush1.bf16.msra.mxu0 %v72
    %457 = vmatprep.subr.bf16.mxu0 0
    %458 = vmatpush1.bf16.msra.mxu0 %v73
    %459 = vmatprep.subr.bf16.mxu0 0
    %460 = vmatpush1.bf16.msra.mxu0 0
    %461 = vmatprep.subr.bf16.mxu0 0
    %462 = vmatpush1.bf16.msra.mxu0 0
    %463 = vmatprep.subr.bf16.mxu0 0
    %464 = vmatpush1.bf16.msra.mxu0 0
    %465 = vmatprep.subr.bf16.mxu0 0
    %466 = vmatpush1.bf16.msra.mxu0 0
    %467 = vmatprep.subr.bf16.mxu0 0
    %468 = vmatpush1.bf16.msra.mxu0 0
    %469 = vmatprep.subr.bf16.mxu0 0
    %470 = vmatpush1.bf16.msra.mxu0 0
    %471 = vmatprep.subr.bf16.mxu0 0
    %472 = vmatpush1.bf16.msra.mxu0 0
    %473 = vmatprep.subr.bf16.mxu0 0
    %474 = vmatpush1.bf16.msra.mxu0 0
    %475 = vmatprep.subr.bf16.mxu0 0
    %476 = vmatpush1.bf16.msra.mxu0 0
    %477 = vmatprep.subr.bf16.mxu0 0
    %478 = vmatpush1.bf16.msra.mxu0 0
    %479 = vmatprep.subr.bf16.mxu0 0
    %480 = vmatpush1.bf16.msra.mxu0 0
    %481 = vmatprep.subr.bf16.mxu0 0
    %482 = vmatpush1.bf16.msra.mxu0 0
    %483 = vmatprep.subr.bf16.mxu0 0
    %484 = vmatpush1.bf16.msra.mxu0 0
    %485 = vmatprep.subr.bf16.mxu0 0
    %486 = vmatpush1.bf16.msra.mxu0 0
    %487 = vmatprep.mubr.bf16.mxu0 0
    %488 = vmatmul.mubr.bf16.gmra.mrb[0].mxu0 %v453
    %v489 = vpop.f32.mrb[0].mxu0
    %v490 = vadd.f32 0.0, %v489
    %v491 = vpop.f32.mrb[0].mxu0
    %v492 = vpop.f32.mrb[0].mxu0
    %v493 = vpop.f32.mrb[0].mxu0
    %494 = vdwg.mxu0
    %v495 = vadd.f32 %v450, %v490
    %v496 = vxor.u32 %v495, 2147483648
    %v497 = vmul.f32 %v496, 1.442695
    %v498 = vpow.pop %v497
    %v499 = vadd.f32 %v498, 1.0
    %v500 = vrcp.pop %v499
    %v501 = vmul.f32 1.0, %v500
    %v502 = vtanh.pop %v495
    %504 = vrot.lane.b32.xlu0 %v447, 32
    %v505 = vpop.permute.xlu0 %504
    %v507 = vmul.f32 %v501, %v505
    %509 = vrot.lane.b32.xlu0 %v502, 32
    %v510 = vpop.permute.xlu0 %509
    %v512 = vmul.f32 %v501, %v510
    %514 = vrot.lane.b32.xlu0 %v512, 32
    %v515 = vpop.permute.xlu0 %514
    %v517 = vadd.f32 %v507, %v515
    %v518 = vtanh.pop %v517
    %520 = vrot.lane.b32.xlu0 %v518, 32
    %v521 = vpop.permute.xlu0 %520
    %v523 = vmul.f32 %v501, %v521
    %s524 = ssub.s32 3, %s61
    %v525 = vstv %s448
    %v526 = vstv %s524
    %v527 = vsel %vm58, %v525, %v526
    %vm528 = vcmp.ge.s32.totalorder %v527, 0
    %vm529 = vcmp.lt.s32.totalorder %v527, %v156
    %vm530 = vmand %vm528, %vm529
    %532 = vrot.lane.b32.xlu0 %v523, 64
    %v533 = vpop.permute.xlu0 %532
    %v535 = vsel %vm530, %v533, %v442
    %537 = vrot.lane.b32.xlu0 %v517, 96
    %v538 = vpop.permute.xlu0 %537
    %v540 = vsel %vm530, %v538, %v447
    %s541 = sadd.s32 %s61, 5
    %s542 = scalar_lea.vmem [#allocation4], 10
    %v543 = vld [vmem:[%s542] sm:$0x3]
    %v544 = vpack.c.bf16 %v535, %v535
    %v546 = vsel %vm76, %v544, 0
    %548 = vmatprep.subr.bf16.mxu0 0
    %549 = vmatpush1.bf16.msra.mxu0 %v72
    %550 = vmatprep.subr.bf16.mxu0 0
    %551 = vmatpush1.bf16.msra.mxu0 %v73
    %552 = vmatprep.subr.bf16.mxu0 0
    %553 = vmatpush1.bf16.msra.mxu0 0
    %554 = vmatprep.subr.bf16.mxu0 0
    %555 = vmatpush1.bf16.msra.mxu0 0
    %556 = vmatprep.subr.bf16.mxu0 0
    %557 = vmatpush1.bf16.msra.mxu0 0
    %558 = vmatprep.subr.bf16.mxu0 0
    %559 = vmatpush1.bf16.msra.mxu0 0
    %560 = vmatprep.subr.bf16.mxu0 0
    %561 = vmatpush1.bf16.msra.mxu0 0
    %562 = vmatprep.subr.bf16.mxu0 0
    %563 = vmatpush1.bf16.msra.mxu0 0
    %564 = vmatprep.subr.bf16.mxu0 0
    %565 = vmatpush1.bf16.msra.mxu0 0
    %566 = vmatprep.subr.bf16.mxu0 0
    %567 = vmatpush1.bf16.msra.mxu0 0
    %568 = vmatprep.subr.bf16.mxu0 0
    %569 = vmatpush1.bf16.msra.mxu0 0
    %570 = vmatprep.subr.bf16.mxu0 0
    %571 = vmatpush1.bf16.msra.mxu0 0
    %572 = vmatprep.subr.bf16.mxu0 0
    %573 = vmatpush1.bf16.msra.mxu0 0
    %574 = vmatprep.subr.bf16.mxu0 0
    %575 = vmatpush1.bf16.msra.mxu0 0
    %576 = vmatprep.subr.bf16.mxu0 0
    %577 = vmatpush1.bf16.msra.mxu0 0
    %578 = vmatprep.subr.bf16.mxu0 0
    %579 = vmatpush1.bf16.msra.mxu0 0
    %580 = vmatprep.mubr.bf16.mxu0 0
    %581 = vmatmul.mubr.bf16.gmra.mrb[0].mxu0 %v546
    %v582 = vpop.f32.mrb[0].mxu0
    %v583 = vadd.f32 0.0, %v582
    %v584 = vpop.f32.mrb[0].mxu0
    %v585 = vpop.f32.mrb[0].mxu0
    %v586 = vpop.f32.mrb[0].mxu0
    %587 = vdwg.mxu0
    %v588 = vadd.f32 %v543, %v583
    %v589 = vxor.u32 %v588, 2147483648
    %v590 = vmul.f32 %v589, 1.442695
    %v591 = vpow.pop %v590
    %v592 = vadd.f32 %v591, 1.0
    %v593 = vrcp.pop %v592
    %v594 = vmul.f32 1.0, %v593
    %v595 = vtanh.pop %v588
    %597 = vrot.lane.b32.xlu0 %v540, 32
    %v598 = vpop.permute.xlu0 %597
    %v600 = vmul.f32 %v594, %v598
    %602 = vrot.lane.b32.xlu0 %v595, 32
    %v603 = vpop.permute.xlu0 %602
    %v605 = vmul.f32 %v594, %v603
    %607 = vrot.lane.b32.xlu0 %v605, 32
    %v608 = vpop.permute.xlu0 %607
    %v610 = vadd.f32 %v600, %v608
    %v611 = vtanh.pop %v610
    %613 = vrot.lane.b32.xlu0 %v611, 32
    %v614 = vpop.permute.xlu0 %613
    %v616 = vmul.f32 %v594, %v614
    %s617 = ssub.s32 2, %s61
    %v618 = vstv %s541
    %v619 = vstv %s617
    %v620 = vsel %vm58, %v618, %v619
    %vm621 = vcmp.ge.s32.totalorder %v620, 0
    %vm622 = vcmp.lt.s32.totalorder %v620, %v156
    %vm623 = vmand %vm621, %vm622
    %625 = vrot.lane.b32.xlu0 %v616, 64
    %v626 = vpop.permute.xlu0 %625
    %v628 = vsel %vm623, %v626, %v535
    %630 = vrot.lane.b32.xlu0 %v610, 96
    %v631 = vpop.permute.xlu0 %630
    %v633 = vsel %vm623, %v631, %v540
    %s634 = sadd.s32 %s61, 6
    %s635 = scalar_lea.vmem [#allocation4], 12
    %v636 = vld [vmem:[%s635] sm:$0x3]
    %v637 = vpack.c.bf16 %v628, %v628
    %v639 = vsel %vm76, %v637, 0
    %641 = vmatprep.subr.bf16.mxu0 0
    %642 = vmatpush1.bf16.msra.mxu0 %v72
    %643 = vmatprep.subr.bf16.mxu0 0
    %644 = vmatpush1.bf16.msra.mxu0 %v73
    %645 = vmatprep.subr.bf16.mxu0 0
    %646 = vmatpush1.bf16.msra.mxu0 0
    %647 = vmatprep.subr.bf16.mxu0 0
    %648 = vmatpush1.bf16.msra.mxu0 0
    %649 = vmatprep.subr.bf16.mxu0 0
    %650 = vmatpush1.bf16.msra.mxu0 0
    %651 = vmatprep.subr.bf16.mxu0 0
    %652 = vmatpush1.bf16.msra.mxu0 0
    %653 = vmatprep.subr.bf16.mxu0 0
    %654 = vmatpush1.bf16.msra.mxu0 0
    %655 = vmatprep.subr.bf16.mxu0 0
    %656 = vmatpush1.bf16.msra.mxu0 0
    %657 = vmatprep.subr.bf16.mxu0 0
    %658 = vmatpush1.bf16.msra.mxu0 0
    %659 = vmatprep.subr.bf16.mxu0 0
    %660 = vmatpush1.bf16.msra.mxu0 0
    %661 = vmatprep.subr.bf16.mxu0 0
    %662 = vmatpush1.bf16.msra.mxu0 0
    %663 = vmatprep.subr.bf16.mxu0 0
    %664 = vmatpush1.bf16.msra.mxu0 0
    %665 = vmatprep.subr.bf16.mxu0 0
    %666 = vmatpush1.bf16.msra.mxu0 0
    %667 = vmatprep.subr.bf16.mxu0 0
    %668 = vmatpush1.bf16.msra.mxu0 0
    %669 = vmatprep.subr.bf16.mxu0 0
    %670 = vmatpush1.bf16.msra.mxu0 0
    %671 = vmatprep.subr.bf16.mxu0 0
    %672 = vmatpush1.bf16.msra.mxu0 0
    %673 = vmatprep.mubr.bf16.mxu0 0
    %674 = vmatmul.mubr.bf16.gmra.mrb[0].mxu0 %v639
    %v675 = vpop.f32.mrb[0].mxu0
    %v676 = vadd.f32 0.0, %v675
    %v677 = vpop.f32.mrb[0].mxu0
    %v678 = vpop.f32.mrb[0].mxu0
    %v679 = vpop.f32.mrb[0].mxu0
    %680 = vdwg.mxu0
    %v681 = vadd.f32 %v636, %v676
    %v682 = vxor.u32 %v681, 2147483648
    %v683 = vmul.f32 %v682, 1.442695
    %v684 = vpow.pop %v683
    %v685 = vadd.f32 %v684, 1.0
    %v686 = vrcp.pop %v685
    %v687 = vmul.f32 1.0, %v686
    %v688 = vtanh.pop %v681
    %690 = vrot.lane.b32.xlu0 %v633, 32
    %v691 = vpop.permute.xlu0 %690
    %v693 = vmul.f32 %v687, %v691
    %695 = vrot.lane.b32.xlu0 %v688, 32
    %v696 = vpop.permute.xlu0 %695
    %v698 = vmul.f32 %v687, %v696
    %700 = vrot.lane.b32.xlu0 %v698, 32
    %v701 = vpop.permute.xlu0 %700
    %v703 = vadd.f32 %v693, %v701
    %v704 = vtanh.pop %v703
    %706 = vrot.lane.b32.xlu0 %v704, 32
    %v707 = vpop.permute.xlu0 %706
    %v709 = vmul.f32 %v687, %v707
    %s710 = ssub.s32 1, %s61
    %v711 = vstv %s634
    %v712 = vstv %s710
    %v713 = vsel %vm58, %v711, %v712
    %vm714 = vcmp.ge.s32.totalorder %v713, 0
    %vm715 = vcmp.lt.s32.totalorder %v713, %v156
    %vm716 = vmand %vm714, %vm715
    %718 = vrot.lane.b32.xlu0 %v709, 64
    %v719 = vpop.permute.xlu0 %718
    %v721 = vsel %vm716, %v719, %v628
    %723 = vrot.lane.b32.xlu0 %v703, 96
    %v724 = vpop.permute.xlu0 %723
    %v726 = vsel %vm716, %v724, %v633
    %s727 = sadd.s32 %s61, 7
    %s728 = scalar_lea.vmem [#allocation4], 14
    %v729 = vld [vmem:[%s728] sm:$0x3]
    %v730 = vpack.c.bf16 %v721, %v721
    %v732 = vsel %vm76, %v730, 0
    %734 = vmatprep.subr.bf16.mxu0 0
    %735 = vmatpush1.bf16.msra.mxu0 %v72
    %736 = vmatprep.subr.bf16.mxu0 0
    %737 = vmatpush1.bf16.msra.mxu0 %v73
    %738 = vmatprep.subr.bf16.mxu0 0
    %739 = vmatpush1.bf16.msra.mxu0 0
    %740 = vmatprep.subr.bf16.mxu0 0
    %741 = vmatpush1.bf16.msra.mxu0 0
    %742 = vmatprep.subr.bf16.mxu0 0
    %743 = vmatpush1.bf16.msra.mxu0 0
    %744 = vmatprep.subr.bf16.mxu0 0
    %745 = vmatpush1.bf16.msra.mxu0 0
    %746 = vmatprep.subr.bf16.mxu0 0
    %747 = vmatpush1.bf16.msra.mxu0 0
    %748 = vmatprep.subr.bf16.mxu0 0
    %749 = vmatpush1.bf16.msra.mxu0 0
    %750 = vmatprep.subr.bf16.mxu0 0
    %751 = vmatpush1.bf16.msra.mxu0 0
    %752 = vmatprep.subr.bf16.mxu0 0
    %753 = vmatpush1.bf16.msra.mxu0 0
    %754 = vmatprep.subr.bf16.mxu0 0
    %755 = vmatpush1.bf16.msra.mxu0 0
    %756 = vmatprep.subr.bf16.mxu0 0
    %757 = vmatpush1.bf16.msra.mxu0 0
    %758 = vmatprep.subr.bf16.mxu0 0
    %759 = vmatpush1.bf16.msra.mxu0 0
    %760 = vmatprep.subr.bf16.mxu0 0
    %761 = vmatpush1.bf16.msra.mxu0 0
    %762 = vmatprep.subr.bf16.mxu0 0
    %763 = vmatpush1.bf16.msra.mxu0 0
    %764 = vmatprep.subr.bf16.mxu0 0
    %765 = vmatpush1.bf16.msra.mxu0 0
    %766 = vmatprep.mubr.bf16.mxu0 0
    %767 = vmatmul.mubr.bf16.gmra.mrb[0].mxu0 %v732
    %v768 = vpop.f32.mrb[0].mxu0
    %v769 = vadd.f32 0.0, %v768
    %v770 = vpop.f32.mrb[0].mxu0
    %v771 = vpop.f32.mrb[0].mxu0
    %v772 = vpop.f32.mrb[0].mxu0
    %773 = vdwg.mxu0
    %v774 = vadd.f32 %v729, %v769
    %v775 = vxor.u32 %v774, 2147483648
    %v776 = vmul.f32 %v775, 1.442695
    %v777 = vpow.pop %v776
    %v778 = vadd.f32 %v777, 1.0
    %v779 = vrcp.pop %v778
    %v780 = vmul.f32 1.0, %v779
    %v781 = vtanh.pop %v774
    %783 = vrot.lane.b32.xlu0 %v726, 32
    %v784 = vpop.permute.xlu0 %783
    %v786 = vmul.f32 %v780, %v784
    %788 = vrot.lane.b32.xlu0 %v781, 32
    %v789 = vpop.permute.xlu0 %788
    %v791 = vmul.f32 %v780, %v789
    %793 = vrot.lane.b32.xlu0 %v791, 32
    %v794 = vpop.permute.xlu0 %793
    %v796 = vadd.f32 %v786, %v794
    %v797 = vtanh.pop %v796
    %799 = vrot.lane.b32.xlu0 %v797, 32
    %v800 = vpop.permute.xlu0 %799
    %v802 = vmul.f32 %v780, %v800
    %s803 = ssub.s32 0, %s61
    %v804 = vstv %s727
    %v805 = vstv %s803
    %v806 = vsel %vm58, %v804, %v805
    %vm807 = vcmp.ge.s32.totalorder %v806, 0
    %vm808 = vcmp.lt.s32.totalorder %v806, %v156
    %vm809 = vmand %vm807, %vm808
    %811 = vrot.lane.b32.xlu0 %v802, 64
    %v812 = vpop.permute.xlu0 %811
    %v814 = vsel %vm809, %v812, %v721
    %816 = vrot.lane.b32.xlu0 %v796, 96
    %v817 = vpop.permute.xlu0 %816
    %v819 = vsel %vm809, %v817, %v726
    %vm820 = vcmask 254976
    %821 = vst.msk [vmem:[#allocation2] sm:$0x3] %vm820, %v814
    %822 = vst.msk [vmem:[#allocation3] sm:$0x3] %vm820, %v819
    %823 = vst.msk [vmem:[#allocation9] sm:$0x3] %vm820, %v814
    // Predicated region
    $region26: #{tpu_custom_call.1} parent=1 // pred_check
      _
    $region27: #{tpu_custom_call.1} parent=1 // pred_check_branch
      %825 = sbr.rel (0) target = $region29
    $region28: #{tpu_custom_call.1} parent=1 // pred_region
      %s827 = ssub.s32 32, 32
      %828 = vsyncadd [#allocation6], %s827
      %s830 = sshll.u32 [#allocation9], 4
      %s831 = int_to_ptr.vmem [resolvable:$true] %s830
      %833 = dma.vmem_to_hbm [thread:$0]  %s831, 32, %s3, [#allocation6]
    $region29: #{tpu_custom_call.1} parent=1 // pred_fallthru
      _
    // Predicated region
    $region30: #{tpu_custom_call.1} parent=1 // pred_check
      _
    $region31: #{tpu_custom_call.1} parent=1 // pred_check_branch
      %835 = sbr.rel (0) target = $region33
    $region32: #{tpu_custom_call.1} parent=1 // pred_region
      %836 = dma.done [#allocation6], 32
    $region33: #{tpu_custom_call.1} parent=1 // pred_fallthru
      _
    %837 = vsyncpa [#allocation5], 1
    %838 = vsyncpa [#allocation8], 1
    %839 = vsyncpa [#allocation6], 1

</llo_original>
